<compile_context>
chip_gen: v7x
topology: tpu7x:2x2x1
jax: 0.10.0
libtpu: 0.0.40
codegen_flags: <defaults>
</compile_context>

<pallas_src>
import jax
import jax.numpy as jnp
from jax.experimental import pallas as pl
from jax.experimental.pallas import tpu as pltpu


def _recourse_kernel(x_ref, a_ref, out_ref):
    # out = x + action  (action broadcast over the batch/sublane axis)
    out_ref[...] = x_ref[...] + a_ref[...]


def _round_up(n: int, m: int) -> int:
    return ((n + m - 1) // m) * m


def recourse_forward(
    x: jax.Array,
    action: jax.Array,
    *,
    vmem_tile_budget_bytes: int = 24 * 1024 * 1024,
    vmem_limit_bytes: int = 48 * 1024 * 1024,
    min_pallas_bytes: int = 2 * 1024 * 1024,
):
    """Pallas equivalent of Recourse.forward.

    x:      (B, F)
    action: (F,)   (the nn.Parameter)
    returns (x + action, cost) with cost an (independent) copy of action.
    """
    B, F = x.shape
    assert action.shape == (F,)
    itemsize = jnp.dtype(x.dtype).itemsize

    # cost = deepcopy(action): JAX arrays are immutable, so a fresh handle to
    # the same values matches the PyTorch semantics exactly.
    cost = jnp.asarray(action)

    # --- tiny-input fast path: launch overhead >> HBM traffic ----------------
    if B * F * itemsize < min_pallas_bytes:
        return x + action, cost

    a2d = action.reshape(1, F)

    # dtype-aware sublane tile: 8 (f32), 16 (bf16/f16), 32 (int8/fp8)
    sublane = max(8, 32 // itemsize)
    padded_b = _round_up(B, sublane)

    def tile_bytes(tb, tf):
        # double-buffered x-in + out tiles, plus double-buffered action row
        return (4 * tb + 2) * tf * itemsize

    # --- tiling ---------------------------------------------------------------
    if tile_bytes(sublane, F) <= vmem_tile_budget_bytes:
        # Full-row tiles: 1-D grid over batch, fully contiguous DMAs, the
        # action block index is constant so it is fetched once.
        tf = F
        tb = (vmem_tile_budget_bytes // (4 * F * itemsize)) // sublane * sublane
        tb = max(sublane, min(tb, padded_b))
        # Guarantee >=2 grid blocks when possible so v7x uses both TCs.
        if pl.cdiv(B, tb) == 1 and padded_b >= 2 * sublane:
            tb = _round_up(pl.cdiv(padded_b, 2), sublane)

        grid = (pl.cdiv(B, tb),)
        in_specs = [
            pl.BlockSpec((tb, F), lambda i: (i, 0)),   # x tile
            pl.BlockSpec((1, F), lambda i: (0, 0)),    # action (fetched once)
        ]
        out_specs = pl.BlockSpec((tb, F), lambda i: (i, 0))
        dim_sem = ("parallel",)
    else:
        # F too large for a full-row tile under the budget: split the feature
        # axis into 128-multiples (boundary partial block handled by Pallas).
        tb = sublane
        tf = (vmem_tile_budget_bytes // (4 * tb * itemsize)) // 128 * 128
        tf = max(128, min(tf, _round_up(F, 128)))

        # Feature axis is the OUTER (slow) grid axis so the action block index
        # is constant across the inner batch sweep and its DMA is skipped.
        grid = (pl.cdiv(F, tf), pl.cdiv(B, tb))
        in_specs = [
            pl.BlockSpec((tb, tf), lambda j, i: (i, j)),   # x tile
            pl.BlockSpec((1, tf), lambda j, i: (0, j)),    # action row slice
        ]
        out_specs = pl.BlockSpec((tb, tf), lambda j, i: (i, j))
        dim_sem = ("parallel", "parallel")

    out = pl.pallas_call(
        _recourse_kernel,
        out_shape=jax.ShapeDtypeStruct((B, F), x.dtype),
        grid=grid,
        in_specs=in_specs,
        out_specs=out_specs,
        compiler_params=pltpu.CompilerParams(
            dimension_semantics=dim_sem,
            vmem_limit_bytes=vmem_limit_bytes,
        ),
    )(x, a2d)

    return out, cost


if __name__ == "__main__":
    key = jax.random.PRNGKey(0)
    B, F = 8, 128

    kx, ka = jax.random.split(key)
    x = jax.random.normal(kx, (B, F), dtype=jnp.float32)
    # nn.Parameter(pt.zeros(size)) initializes to zeros; perturb
    # deterministically so the add is non-trivial to verify.
    action = jax.random.normal(ka, (F,), dtype=jnp.float32) * 0.1

    # min_pallas_bytes=0 forces the Pallas path even at this tiny test shape
    # (production default bypasses Pallas for < 2 MiB inputs).
    out, cost = recourse_forward(x, action, min_pallas_bytes=0)
    jax.block_until_ready((out, cost))

    # Reference check against plain-JAX semantics of the PyTorch forward.
    ref_out = x + action
    ref_cost = action
    assert jnp.allclose(out, ref_out, atol=1e-6), "output mismatch"
    assert jnp.allclose(cost, ref_cost, atol=1e-6), "cost mismatch"
    assert out.shape == (B, F) and cost.shape == (F,)

    # Also exercise the fast path once for coverage.
    out2, cost2 = recourse_forward(x, action)
    jax.block_until_ready((out2, cost2))
    assert jnp.allclose(out2, ref_out, atol=1e-6), "fast-path output mismatch"

    print("KERNEL_OK")
</pallas_src>

<mosaic_0001>
module attributes {stable_mosaic.version = 11 : i64} {
  func.func @_recourse_kernel(%arg0: i32, %arg1: memref<8x128xf32, #tpu.memory_space<vmem>>, %arg2: memref<1x128xf32, #tpu.memory_space<vmem>>, %arg3: memref<8x128xf32, #tpu.memory_space<vmem>>) attributes {dimension_semantics = [#tpu.dimension_semantics<parallel>], iteration_bounds = array<i64: 1>, scalar_prefetch = 0 : i64, scratch_operands = 0 : i64, tpu.core_type = #tpu.core_type<tc>, window_params = [{transform_indices = @transform_0, window_bounds = array<i64: 8, 128>}, {pipeline_mode = #tpu.pipeline_mode<synchronous>, transform_indices = @transform_1, window_bounds = array<i64: 1, 128>}, {transform_indices = @transform_2, window_bounds = array<i64: 8, 128>}]} {
    %c0 = arith.constant 0 : index
    %c0_0 = arith.constant 0 : index
    %0 = vector.load %arg1[%c0, %c0_0] : memref<8x128xf32, #tpu.memory_space<vmem>>, vector<8x128xf32>
    %c0_1 = arith.constant 0 : index
    %c0_2 = arith.constant 0 : index
    %1 = vector.load %arg2[%c0_1, %c0_2] : memref<1x128xf32, #tpu.memory_space<vmem>>, vector<1x128xf32>
    %2 = vector.broadcast %1 : vector<1x128xf32> to vector<8x128xf32>
    %3 = arith.addf %0, %2 : vector<8x128xf32>
    %c0_3 = arith.constant 0 : index
    %c0_4 = arith.constant 0 : index
    %4 = vector.load %arg3[%c0_3, %c0_4] : memref<8x128xf32, #tpu.memory_space<vmem>>, vector<8x128xf32>
    tpu.vector_store %arg3[%c0_3, %c0_4], %3 {strides = array<i32>} : memref<8x128xf32, #tpu.memory_space<vmem>>, vector<8x128xf32>,
    return
  }
  func.func @transform_0(%arg0: i32) -> (i32, i32) {
    %c0_i32 = arith.constant 0 : i32
    %c0_i32_0 = arith.constant 0 : i32
    return %arg0, %c0_i32 : i32, i32
  }
  func.func @transform_1(%arg0: i32) -> (i32, i32) {
    %c0_i32 = arith.constant 0 : i32
    %c0_i32_0 = arith.constant 0 : i32
    %c0_i32_1 = arith.constant 0 : i32
    return %c0_i32, %c0_i32_0 : i32, i32
  }
  func.func @transform_2(%arg0: i32) -> (i32, i32) {
    %c0_i32 = arith.constant 0 : i32
    %c0_i32_0 = arith.constant 0 : i32
    return %arg0, %c0_i32 : i32, i32
  }
}

</mosaic_0001>

<llo_original>
// kernel: tpu_custom_call.1
$region0: #{tpu_custom_call.1}
  #allocation0 [shape = 'u32[]', space=smem, size = 0x4, offset = 0x4, fixed_abs, tag = 'smem constant byte address 0x4 - core index']
  #allocation1 [shape = 'u32[144,128]{1,0:T(1,128)}', space=vmem, size = 0x12000, scoped, tag = 'internal scratch']
  %s0 = inlined_call_operand.hbm [shape: f32[8,128], index: 0, kind: input, shape index: {}]
  %s1 = inlined_call_operand.vmem [shape: f32[1,128], index: 1, kind: input, shape index: {}]
  %s2 = inlined_call_operand.hbm [shape: f32[8,128], index: 2, kind: output, shape index: {}]
  %s3 = sld [smem:[#allocation0]]
  $region22: #{tpu_custom_call.1} parent=0
    _
  %s5 = ssub.s32 1, %s3
  %s6 = scalar_select 0, %s5, %s3
  $region1: #{tpu_custom_call.1} parent=0
    #allocation2 [shape = 'u8[4096]{0}', space=vmem, size = 0x1000, scoped, tag = 'input window, operand 0, single buffered']
    #allocation3 [shape = 's32[1]{0}', space=sflag, size = 0x4, scoped, tag = 'scoped memory for tpu_custom_call.1']
    #allocation4 [shape = 's32[1]{0}', space=sflag, size = 0x4, scoped, tag = 'scoped memory for tpu_custom_call.1']
    #allocation5 [shape = 'u8[4096]{0}', space=vmem, size = 0x1000, scoped, tag = 'output window, operand 0, single buffered']
    %7 = vsyncpa [#allocation3], 0
    %8 = vsyncpa [#allocation4], 0
    // Predicated region
    $region2: #{tpu_custom_call.1} parent=1 // pred_check
      _
    $region3: #{tpu_custom_call.1} parent=1 // pred_check_branch
      %10 = sbr.rel (0) target = $region5
    $region4: #{tpu_custom_call.1} parent=1 // pred_region
      %s12 = ssub.s32 128, 128
      %13 = vsyncadd [#allocation3], %s12
      %s15 = sshll.u32 [#allocation2], 4
      %s16 = int_to_ptr.vmem [resolvable:$true] %s15
      %18 = dma.hbm_to_vmem [thread:$0]  %s0, 128, %s16, [#allocation3]
    $region5: #{tpu_custom_call.1} parent=1 // pred_fallthru
      _
    // Predicated region
    $region6: #{tpu_custom_call.1} parent=1 // pred_check
      _
    $region7: #{tpu_custom_call.1} parent=1 // pred_check_branch
      %20 = sbr.rel (0) target = $region9
    $region8: #{tpu_custom_call.1} parent=1 // pred_region
      _
    $region9: #{tpu_custom_call.1} parent=1 // pred_fallthru
      _
    // Predicated region
    $region10: #{tpu_custom_call.1} parent=1 // pred_check
      _
    $region11: #{tpu_custom_call.1} parent=1 // pred_check_branch
      %22 = sbr.rel (0) target = $region13
    $region12: #{tpu_custom_call.1} parent=1 // pred_region
      %23 = dma.done [#allocation3], 128
    $region13: #{tpu_custom_call.1} parent=1 // pred_fallthru
      _
    %v24 = vld [vmem:[#allocation2] sm:$0xff]
    %v25 = vld [vmem:[%s1] sm:$0x1]
    %v27 = vlaneseq
    %v28 = vshrl.u32 %v27, 7
    %v29 = vsub.s32 0, %v28
    %v30 = vrot.slane %v25, %v29
    %v32 = vadd.f32 %v24, %v30
    %33 = vst [vmem:[#allocation5] sm:$0xff] %v32
    // Predicated region
    $region14: #{tpu_custom_call.1} parent=1 // pred_check
      _
    $region15: #{tpu_custom_call.1} parent=1 // pred_check_branch
      %35 = sbr.rel (0) target = $region17
    $region16: #{tpu_custom_call.1} parent=1 // pred_region
      %s37 = ssub.s32 128, 128
      %38 = vsyncadd [#allocation4], %s37
      %s40 = sshll.u32 [#allocation5], 4
      %s41 = int_to_ptr.vmem [resolvable:$true] %s40
      %43 = dma.vmem_to_hbm [thread:$0]  %s41, 128, %s2, [#allocation4]
    $region17: #{tpu_custom_call.1} parent=1 // pred_fallthru
      _
    // Predicated region
    $region18: #{tpu_custom_call.1} parent=1 // pred_check
      _
    $region19: #{tpu_custom_call.1} parent=1 // pred_check_branch
      %45 = sbr.rel (0) target = $region21
    $region20: #{tpu_custom_call.1} parent=1 // pred_region
      %46 = dma.done [#allocation4], 128
    $region21: #{tpu_custom_call.1} parent=1 // pred_fallthru
      _
    %47 = vsyncpa [#allocation3], 1
    %48 = vsyncpa [#allocation4], 1

</llo_original>
